<compile_context>
chip_gen: v5e
topology: v5e:2x2
jax: 0.10.0
libtpu: 0.0.40
codegen_flags: <defaults>
</compile_context>

<pallas_src>
import functools
import math

import jax
import jax.numpy as jnp
from jax.experimental import pallas as pl
from jax.experimental.pallas import tpu as pltpu


def _round_up(x, m):
    return (x + m - 1) // m * m


# --------------------------------------------------------------------------
# Kernels
# --------------------------------------------------------------------------

def _layer_norm_cl_kernel(x_ref, w_ref, b_ref, o_ref, *, eps):
    """channels_last tile: x_ref (TM, C); normalize over the last (lane) axis."""
    x = x_ref[...].astype(jnp.float32)                       # (TM, C)
    mean = jnp.mean(x, axis=-1, keepdims=True)               # (TM, 1)
    mean_sq = jnp.mean(x * x, axis=-1, keepdims=True)        # single-pass stats
    var = jnp.maximum(mean_sq - mean * mean, 0.0)
    inv = jax.lax.rsqrt(var + eps)
    w = w_ref[...].astype(jnp.float32)                       # (1, C)
    b = b_ref[...].astype(jnp.float32)
    o_ref[...] = ((x - mean) * inv * w + b).astype(o_ref.dtype)


def _layer_norm_cf_kernel(x_ref, w_ref, b_ref, o_ref, *, eps):
    """channels_first tile: x_ref (C, T); normalize over the sublane (C) axis.

    Lane axis is the spatial H*W tile (multiple of 128) -> lane-dense stores.
    """
    x = x_ref[...].astype(jnp.float32)                       # (C, T)
    mean = jnp.mean(x, axis=0, keepdims=True)                # (1, T)
    mean_sq = jnp.mean(x * x, axis=0, keepdims=True)
    var = jnp.maximum(mean_sq - mean * mean, 0.0)
    inv = jax.lax.rsqrt(var + eps)
    w = w_ref[...].astype(jnp.float32)                       # (C, 1) -> lane bcast
    b = b_ref[...].astype(jnp.float32)
    o_ref[...] = ((x - mean) * inv * w + b).astype(o_ref.dtype)


# --------------------------------------------------------------------------
# Wrappers
# --------------------------------------------------------------------------

def layer_norm_channels_last(x, weight, bias, eps=1e-6,
                             target_block_bytes=2 << 20):
    """x: (..., C); weight/bias: (C,). Normalizes over the last dim."""
    orig_shape = x.shape
    C = orig_shape[-1]
    M = int(math.prod(orig_shape[:-1]))
    itemsize = jnp.dtype(x.dtype).itemsize
    xf = x.reshape(M, C)

    # Rows per tile: big enough to amortize per-step overhead, capped so the
    # double-buffered (in + out) footprint stays small even on v7x.
    tm = max(8, (target_block_bytes // max(1, C * itemsize)) // 8 * 8)
    tm = min(tm, _round_up(M, 8), 4096)
    m_pad = _round_up(M, tm)
    if m_pad != M:
        # Padded rows are normalized independently (garbage) and sliced off.
        xf = jnp.pad(xf, ((0, m_pad - M), (0, 0)))

    w2 = weight.reshape(1, C).astype(jnp.float32)
    b2 = bias.reshape(1, C).astype(jnp.float32)

    out = pl.pallas_call(
        functools.partial(_layer_norm_cl_kernel, eps=eps),
        out_shape=jax.ShapeDtypeStruct((m_pad, C), x.dtype),
        grid_spec=pltpu.PrefetchScalarGridSpec(
            num_scalar_prefetch=0,
            grid=(m_pad // tm,),
            in_specs=[
                pl.BlockSpec((tm, C), lambda i: (i, 0)),
                pl.BlockSpec((1, C), lambda i: (0, 0)),
                pl.BlockSpec((1, C), lambda i: (0, 0)),
            ],
            out_specs=pl.BlockSpec((tm, C), lambda i: (i, 0)),
        ),
        compiler_params=pltpu.CompilerParams(
            dimension_semantics=("parallel",)),
    )(xf, w2, b2)

    if m_pad != M:
        out = out[:M]
    return out.reshape(orig_shape)


def layer_norm_channels_first(x, weight, bias, eps=1e-6,
                              target_block_bytes=2 << 20):
    """x: (N, C, H, W); weight/bias: (C,). Normalizes over the channel dim."""
    N, C, H, W = x.shape
    HW = H * W
    itemsize = jnp.dtype(x.dtype).itemsize
    xf = x.reshape(N, C, HW)          # view; no NCHW->NHWC transpose glue

    # Spatial lanes per tile: multiple of 128 (lane-dense), capped for VMEM.
    t = max(128, (target_block_bytes // max(1, C * itemsize)) // 128 * 128)
    t = min(t, _round_up(HW, 128))
    hw_pad = _round_up(HW, t)
    if hw_pad != HW:
        # Padded columns are independent spatial positions; sliced off below.
        xf = jnp.pad(xf, ((0, 0), (0, 0), (0, hw_pad - HW)))

    w2 = weight.reshape(C, 1).astype(jnp.float32)
    b2 = bias.reshape(C, 1).astype(jnp.float32)

    out = pl.pallas_call(
        functools.partial(_layer_norm_cf_kernel, eps=eps),
        out_shape=jax.ShapeDtypeStruct((N, C, hw_pad), x.dtype),
        grid_spec=pltpu.PrefetchScalarGridSpec(
            num_scalar_prefetch=0,
            grid=(N, hw_pad // t),
            in_specs=[
                pl.BlockSpec((None, C, t), lambda n, j: (n, 0, j)),
                pl.BlockSpec((C, 1), lambda n, j: (0, 0)),
                pl.BlockSpec((C, 1), lambda n, j: (0, 0)),
            ],
            out_specs=pl.BlockSpec((None, C, t), lambda n, j: (n, 0, j)),
        ),
        compiler_params=pltpu.CompilerParams(
            dimension_semantics=("parallel", "parallel")),
    )(xf, w2, b2)

    if hw_pad != HW:
        out = out[:, :, :HW]
    return out.reshape(N, C, H, W)


def layer_norm(x, weight, bias, eps=1e-6, data_format="channels_last"):
    """Mirror of the PyTorch module's forward."""
    if data_format == "channels_last":
        return layer_norm_channels_last(x, weight, bias, eps)
    elif data_format == "channels_first":
        return layer_norm_channels_first(x, weight, bias, eps)
    raise NotImplementedError(data_format)


# --------------------------------------------------------------------------
# Pure-JAX references (mirror the PyTorch forward exactly)
# --------------------------------------------------------------------------

def _reference_channels_last(x, weight, bias, eps=1e-6):
    mean = jnp.mean(x, axis=-1, keepdims=True)
    var = jnp.mean(jnp.square(x - mean), axis=-1, keepdims=True)
    return (x - mean) / jnp.sqrt(var + eps) * weight + bias


def _reference_channels_first(x, weight, bias, eps=1e-6):
    u = jnp.mean(x, axis=1, keepdims=True)
    s = jnp.mean(jnp.square(x - u), axis=1, keepdims=True)
    xn = (x - u) / jnp.sqrt(s + eps)
    return weight[None, :, None, None] * xn + bias[None, :, None, None]


if __name__ == "__main__":
    key = jax.random.PRNGKey(0)
    k1, k2 = jax.random.split(key)

    # ---- channels_first: NCHW input, normalize over C ----------------------
    N, C, H, W = 2, 4, 16, 16
    x_cf = jax.random.normal(k1, (N, C, H, W), dtype=jnp.float32)
    # Fresh module init is weight=1, bias=0; use non-trivial affine params to
    # exercise that code path as well.
    w_cf = 1.0 + 0.1 * jnp.arange(C, dtype=jnp.float32)
    b_cf = 0.05 * jnp.arange(C, dtype=jnp.float32)

    out_cf = layer_norm(x_cf, w_cf, b_cf, eps=1e-6, data_format="channels_first")
    out_cf = jax.block_until_ready(out_cf)
    ref_cf = _reference_channels_first(x_cf, w_cf, b_cf)
    assert out_cf.shape == x_cf.shape, out_cf.shape
    assert jnp.allclose(out_cf, ref_cf, atol=5e-4, rtol=5e-4), \
        float(jnp.max(jnp.abs(out_cf - ref_cf)))

    # ---- channels_last: (N, H, W, C) input, normalize over last dim --------
    Nl, Hl, Wl, Cl = 2, 8, 8, 32
    x_cl = jax.random.normal(k2, (Nl, Hl, Wl, Cl), dtype=jnp.float32)
    w_cl = 1.0 + 0.01 * jnp.arange(Cl, dtype=jnp.float32)
    b_cl = 0.02 * jnp.arange(Cl, dtype=jnp.float32)

    out_cl = layer_norm(x_cl, w_cl, b_cl, eps=1e-6, data_format="channels_last")
    out_cl = jax.block_until_ready(out_cl)
    ref_cl = _reference_channels_last(x_cl, w_cl, b_cl)
    assert out_cl.shape == x_cl.shape, out_cl.shape
    assert jnp.allclose(out_cl, ref_cl, atol=5e-4, rtol=5e-4), \
        float(jnp.max(jnp.abs(out_cl - ref_cl)))

    print("KERNEL_OK")
</pallas_src>

<mosaic_0001>
module attributes {stable_mosaic.version = 11 : i64} {
  func.func @_layer_norm_cf_kernel(%arg0: i32, %arg1: i32, %arg2: memref<1x4x256xf32, #tpu.memory_space<vmem>>, %arg3: memref<4x1xf32, #tpu.memory_space<vmem>>, %arg4: memref<4x1xf32, #tpu.memory_space<vmem>>, %arg5: memref<1x4x256xf32, #tpu.memory_space<vmem>>) attributes {dimension_semantics = [#tpu.dimension_semantics<parallel>, #tpu.dimension_semantics<parallel>], iteration_bounds = array<i64: 2, 1>, scalar_prefetch = 0 : i64, scratch_operands = 0 : i64, tpu.core_type = #tpu.core_type<tc>, window_params = [{transform_indices = @transform_0, window_bounds = array<i64: 1, 4, 256>}, {pipeline_mode = #tpu.pipeline_mode<synchronous>, transform_indices = @transform_1, window_bounds = array<i64: 4, 1>}, {pipeline_mode = #tpu.pipeline_mode<synchronous>, transform_indices = @transform_2, window_bounds = array<i64: 4, 1>}, {transform_indices = @transform_3, window_bounds = array<i64: 1, 4, 256>}]} {
    %c0 = arith.constant 0 : index
    %c0_0 = arith.constant 0 : index
    %c0_1 = arith.constant 0 : index
    %0 = vector.load %arg2[%c0, %c0_0, %c0_1] : memref<1x4x256xf32, #tpu.memory_space<vmem>>, vector<1x4x256xf32>
    %1 = vector.shape_cast %0 : vector<1x4x256xf32> to vector<4x256xf32>
    %cst = arith.constant dense<0.000000e+00> : vector<256xf32>
    %2 = vector.multi_reduction <add>, %1, %cst [0] : vector<4x256xf32> to vector<256xf32>
    %3 = vector.shape_cast %2 : vector<256xf32> to vector<1x256xf32>
    %cst_2 = arith.constant 4.000000e+00 : f32
    %4 = vector.broadcast %cst_2 : f32 to vector<1x256xf32>
    %5 = arith.divf %3, %4 : vector<1x256xf32>
    %6 = arith.mulf %1, %1 : vector<4x256xf32>
    %cst_3 = arith.constant dense<0.000000e+00> : vector<256xf32>
    %7 = vector.multi_reduction <add>, %6, %cst_3 [0] : vector<4x256xf32> to vector<256xf32>
    %8 = vector.shape_cast %7 : vector<256xf32> to vector<1x256xf32>
    %cst_4 = arith.constant 4.000000e+00 : f32
    %9 = vector.broadcast %cst_4 : f32 to vector<1x256xf32>
    %10 = arith.divf %8, %9 : vector<1x256xf32>
    %11 = arith.mulf %5, %5 : vector<1x256xf32>
    %12 = arith.subf %10, %11 : vector<1x256xf32>
    %cst_5 = arith.constant 0.000000e+00 : f32
    %13 = vector.broadcast %cst_5 : f32 to vector<1x256xf32>
    %14 = arith.maximumf %12, %13 : vector<1x256xf32>
    %cst_6 = arith.constant 9.99999997E-7 : f32
    %15 = vector.broadcast %cst_6 : f32 to vector<1x256xf32>
    %16 = arith.addf %14, %15 : vector<1x256xf32>
    %17 = math.rsqrt %16 : vector<1x256xf32>
    %c0_7 = arith.constant 0 : index
    %c0_8 = arith.constant 0 : index
    %18 = vector.load %arg3[%c0_7, %c0_8] : memref<4x1xf32, #tpu.memory_space<vmem>>, vector<4x1xf32>
    %c0_9 = arith.constant 0 : index
    %c0_10 = arith.constant 0 : index
    %19 = vector.load %arg4[%c0_9, %c0_10] : memref<4x1xf32, #tpu.memory_space<vmem>>, vector<4x1xf32>
    %20 = vector.broadcast %5 : vector<1x256xf32> to vector<4x256xf32>
    %21 = arith.subf %1, %20 : vector<4x256xf32>
    %22 = vector.broadcast %17 : vector<1x256xf32> to vector<4x256xf32>
    %23 = arith.mulf %21, %22 : vector<4x256xf32>
    %24 = vector.broadcast %18 : vector<4x1xf32> to vector<4x256xf32>
    %25 = arith.mulf %23, %24 : vector<4x256xf32>
    %26 = vector.broadcast %19 : vector<4x1xf32> to vector<4x256xf32>
    %27 = arith.addf %25, %26 : vector<4x256xf32>
    %c0_11 = arith.constant 0 : index
    %c0_12 = arith.constant 0 : index
    %c0_13 = arith.constant 0 : index
    %28 = vector.load %arg5[%c0_11, %c0_12, %c0_13] : memref<1x4x256xf32, #tpu.memory_space<vmem>>, vector<1x4x256xf32>
    %29 = vector.shape_cast %28 : vector<1x4x256xf32> to vector<4x256xf32>
    %30 = vector.shape_cast %27 : vector<4x256xf32> to vector<1x4x256xf32>
    tpu.vector_store %arg5[%c0_11, %c0_12, %c0_13], %30 {strides = array<i32>} : memref<1x4x256xf32, #tpu.memory_space<vmem>>, vector<1x4x256xf32>,
    return
  }
  func.func @transform_0(%arg0: i32, %arg1: i32) -> (i32, i32, i32) {
    %c0_i32 = arith.constant 0 : i32
    %c0_i32_0 = arith.constant 0 : i32
    return %arg0, %c0_i32, %arg1 : i32, i32, i32
  }
  func.func @transform_1(%arg0: i32, %arg1: i32) -> (i32, i32) {
    %c0_i32 = arith.constant 0 : i32
    %c0_i32_0 = arith.constant 0 : i32
    %c0_i32_1 = arith.constant 0 : i32
    return %c0_i32, %c0_i32_0 : i32, i32
  }
  func.func @transform_2(%arg0: i32, %arg1: i32) -> (i32, i32) {
    %c0_i32 = arith.constant 0 : i32
    %c0_i32_0 = arith.constant 0 : i32
    %c0_i32_1 = arith.constant 0 : i32
    return %c0_i32, %c0_i32_0 : i32, i32
  }
  func.func @transform_3(%arg0: i32, %arg1: i32) -> (i32, i32, i32) {
    %c0_i32 = arith.constant 0 : i32
    %c0_i32_0 = arith.constant 0 : i32
    return %arg0, %c0_i32, %arg1 : i32, i32, i32
  }
}

</mosaic_0001>

<llo_original>
// kernel: tpu_custom_call.1
$region0: #{tpu_custom_call.1}
  #allocation0 [shape = 'u32[]', space=smem, size = 0x4, offset = 0x4, fixed_abs, tag = 'smem constant byte address 0x4 - core index']
  #allocation1 [shape = 'u32[72,128]{1,0:T(1,128)}', space=vmem, size = 0x9000, scoped, tag = 'internal scratch']
  %s0 = inlined_call_operand.hbm [shape: f32[2,4,256], index: 0, kind: input, shape index: {}]
  %s1 = inlined_call_operand.vmem [shape: f32[4,1], index: 1, kind: input, shape index: {}]
  %s2 = inlined_call_operand.vmem [shape: f32[4,1], index: 2, kind: input, shape index: {}]
  %s3 = inlined_call_operand.hbm [shape: f32[2,4,256], index: 3, kind: output, shape index: {}]
  %s4 = sld [smem:[#allocation0]]
  $region49: #{tpu_custom_call.1} parent=0
    _
  %s6 = ssub.s32 1, %s4
  %s7 = scalar_select 0, %s6, %s4
  $region1: #{tpu_custom_call.1} parent=0
    #allocation2 [shape = 'u8[8192]{0}', space=vmem, size = 0x2000, scoped, tag = 'input window, operand 0']
    #allocation3 [shape = 's32[2]{0}', space=sflag, size = 0x8, scoped, tag = 'scoped memory for tpu_custom_call.1']
    #allocation4 [shape = 's32[2]{0}', space=sflag, size = 0x8, scoped, tag = 'scoped memory for tpu_custom_call.1']
    #allocation5 [shape = 'u8[8192]{0}', space=vmem, size = 0x2000, scoped, tag = 'output window, operand 0']
    %8 = vsyncpa [#allocation3], 0
    %s9 = scalar_lea.sflag [#allocation3], 1
    %10 = vsyncpa %s9, 0
    %11 = vsyncpa [#allocation4], 0
    %s12 = scalar_lea.sflag [#allocation4], 1
    %13 = vsyncpa %s12, 0
    loop: start=0, step=1, limit=4
    $region2: #{tpu_custom_call.1} parent=1 // loop_pre_header
      _
    $region3: #{tpu_custom_call.1} parent=1 // loop_header
      %s15 = sphi 0, %s19
      %p16 = scmp.ge.s32.totalorder %s15, 4
      %s22 = sphi 0, %s34
      %s23 = sphi 0, %s30
      %s24 = sphi 0, %s22
      %s25 = sphi 0, %s23
      %s26 = sphi 0, %s24
      %s27 = sphi 0, %s25
      %s39 = sphi 0, %s41
      %s42 = sphi 0, %s39
      %s43 = sphi 0, %s42
      %s59 = sphi 0, %s43
      %s63 = sphi 0, %s63
      %s65 = sphi 0, %s63
      %s66 = sphi 0, %s65
      %s80 = sphi 0, %s66
      %s84 = sphi 0, %s84
      %s86 = sphi 0, %s84
      %s87 = sphi 0, %s86
      %s101 = sphi 0, %s87
      %s109 = sphi 0, %s111
      %s112 = sphi 0, %s109
      %s113 = sphi 0, %s112
      %s129 = sphi 0, %s113
    $region4: #{tpu_custom_call.1} parent=1 // loop_header_branch
      %18 = sbr.rel (%p16) target = $region8
    $region5: #{tpu_custom_call.1} parent=1 // loop_body
      %s20 = ssub.s32 %s15, 1
      %s21 = ssub.s32 %s15, 2
      %s28 = sadd.s32 1, %s23
      %p29 = scmp.ge.s32.totalorder %s28, 1
      %s30 = scalar_select %p29, 0, %s28
      %s31 = sadd.s32 1, %s22
      %s32 = scalar_select %p29, %s31, %s22
      %p33 = scmp.ge.s32.totalorder %s32, 2
      %s34 = scalar_select %p33, 0, %s32
      %s35 = ssub.s32 %s22, %s34
      %s36 = ssub.s32 %s23, %s30
      %s37 = sor.u32 %s35, %s36
      %p38 = scmp.eq.s32.totalorder %s37, 0
      %s40 = sadd.s32 %s39, 1
      %s41 = scalar_select %p38, %s39, %s40
      %p44 = pneg %p38
      %p45 = scmp.eq.s32.totalorder %s15, 1
      %p46 = por %p44, %p45
      %p47 = scmp.ne.s32.totalorder %s39, %s42
      %p48 = scmp.eq.s32.totalorder %s15, 0
      %p49 = por %p47, %p48
      %p50 = scmp.ne.s32.totalorder %s39, %s42
      %p51 = scmp.eq.s32.totalorder %s20, 1
      %p52 = por %p50, %p51
      %p53 = scmp.ne.s32.totalorder %s42, %s43
      %p54 = scmp.eq.s32.totalorder %s20, 0
      %p55 = por %p53, %p54
      %p56 = scmp.ne.s32.totalorder %s42, %s43
      %p57 = scmp.eq.s32.totalorder %s21, 1
      %p58 = por %p56, %p57
      %p60 = scmp.ne.s32.totalorder %s43, %s59
      %p61 = scmp.eq.s32.totalorder %s21, 0
      %p62 = por %p60, %p61
      %s64 = sadd.s32 %s63, 1
      %p67 = scmp.eq.s32.totalorder %s15, 1
      %p68 = scmp.ne.s32.totalorder %s63, %s65
      %p69 = scmp.eq.s32.totalorder %s15, 0
      %p70 = por %p68, %p69
      %p71 = scmp.ne.s32.totalorder %s63, %s65
      %p72 = scmp.eq.s32.totalorder %s20, 1
      %p73 = por %p71, %p72
      %p74 = scmp.ne.s32.totalorder %s65, %s66
      %p75 = scmp.eq.s32.totalorder %s20, 0
      %p76 = por %p74, %p75
      %p77 = scmp.ne.s32.totalorder %s65, %s66
      %p78 = scmp.eq.s32.totalorder %s21, 1
      %p79 = por %p77, %p78
      %p81 = scmp.ne.s32.totalorder %s66, %s80
      %p82 = scmp.eq.s32.totalorder %s21, 0
      %p83 = por %p81, %p82
      %s85 = sadd.s32 %s84, 1
      %p88 = scmp.eq.s32.totalorder %s15, 1
      %p89 = scmp.ne.s32.totalorder %s84, %s86
      %p90 = scmp.eq.s32.totalorder %s15, 0
      %p91 = por %p89, %p90
      %p92 = scmp.ne.s32.totalorder %s84, %s86
      %p93 = scmp.eq.s32.totalorder %s20, 1
      %p94 = por %p92, %p93
      %p95 = scmp.ne.s32.totalorder %s86, %s87
      %p96 = scmp.eq.s32.totalorder %s20, 0
      %p97 = por %p95, %p96
      %p98 = scmp.ne.s32.totalorder %s86, %s87
      %p99 = scmp.eq.s32.totalorder %s21, 1
      %p100 = por %p98, %p99
      %p102 = scmp.ne.s32.totalorder %s87, %s101
      %p103 = scmp.eq.s32.totalorder %s21, 0
      %p104 = por %p102, %p103
      %s105 = ssub.s32 %s22, %s34
      %s106 = ssub.s32 %s23, %s30
      %s107 = sor.u32 %s105, %s106
      %p108 = scmp.eq.s32.totalorder %s107, 0
      %s110 = sadd.s32 %s109, 1
      %s111 = scalar_select %p108, %s109, %s110
      %p114 = pneg %p108
      %p115 = scmp.eq.s32.totalorder %s15, 1
      %p116 = por %p114, %p115
      %p117 = scmp.ne.s32.totalorder %s109, %s112
      %p118 = scmp.eq.s32.totalorder %s15, 0
      %p119 = por %p117, %p118
      %p120 = scmp.ne.s32.totalorder %s109, %s112
      %p121 = scmp.eq.s32.totalorder %s20, 1
      %p122 = por %p120, %p121
      %p123 = scmp.ne.s32.totalorder %s112, %s113
      %p124 = scmp.eq.s32.totalorder %s20, 0
      %p125 = por %p123, %p124
      %p126 = scmp.ne.s32.totalorder %s112, %s113
      %p127 = scmp.eq.s32.totalorder %s21, 1
      %p128 = por %p126, %p127
      %p130 = scmp.ne.s32.totalorder %s113, %s129
      %p131 = scmp.eq.s32.totalorder %s21, 0
      %p132 = por %p130, %p131
      %p133 = scmp.le.s32.totalorder 1, %s15
      %p134 = scmp.lt.s32.totalorder %s15, 3
      %p135 = pnand %p133, %p134
      %p136 = pneg %p135
      // Predicated region
      $region9: #{tpu_custom_call.1} parent=5 // pred_check
        _
      $region10: #{tpu_custom_call.1} parent=5 // pred_check_branch
        %138 = sbr.rel (%p135) target = $region12
      $region11: #{tpu_custom_call.1} parent=5 // pred_region
        %s139 = ssub.s32 %s15, 1
        // Predicated region
        $region13: #{tpu_custom_call.1} parent=11 // pred_check
          %p140 = pneg %p76
        $region14: #{tpu_custom_call.1} parent=11 // pred_check_branch
          %142 = sbr.rel (%p140) target = $region16
        $region15: #{tpu_custom_call.1} parent=11 // pred_region
          _
        $region16: #{tpu_custom_call.1} parent=11 // pred_fallthru
          _
        // Predicated region
        $region17: #{tpu_custom_call.1} parent=11 // pred_check
          %p143 = pneg %p97
        $region18: #{tpu_custom_call.1} parent=11 // pred_check_branch
          %145 = sbr.rel (%p143) target = $region20
        $region19: #{tpu_custom_call.1} parent=11 // pred_region
          _
        $region20: #{tpu_custom_call.1} parent=11 // pred_fallthru
          _
      $region12: #{tpu_custom_call.1} parent=5 // pred_fallthru
        _
      %p146 = scmp.lt.s32.totalorder %s15, 2
      // Predicated region
      $region21: #{tpu_custom_call.1} parent=5 // pred_check
        %p147 = pneg %p146
      $region22: #{tpu_custom_call.1} parent=5 // pred_check_branch
        %149 = sbr.rel (%p147) target = $region24
      $region23: #{tpu_custom_call.1} parent=5 // pred_region
        // Predicated region
        $region25: #{tpu_custom_call.1} parent=23 // pred_check
          %p150 = pneg %p49
        $region26: #{tpu_custom_call.1} parent=23 // pred_check_branch
          %152 = sbr.rel (%p150) target = $region28
        $region27: #{tpu_custom_call.1} parent=23 // pred_region
          %s153 = sand.u32 %s39, 1
          %s154 = scalar_lea.sflag [#allocation3], %s153
          %s155 = sand.u32 %s39, 1
          %s156 = smul.addr %s155, 8
          %s157 = scalar_lea.vmem [#allocation2], %s156
          %s158 = smul.u32 2, %s23
          %160 = vsyncadd %s154, 0
          %s161 = smul.addr %s22, 2
          %s162 = sadd.s32 %s158, %s161
          %s163 = smul.addr %s162, 4
          %s164 = scalar_lea.hbm %s0, %s163
          %s166 = sshll.u32 %s164, 4
          %s167 = int_to_ptr.hbm [resolvable:$true] %s166
          %s168 = sshll.u32 %s157, 4
          %s169 = int_to_ptr.vmem [resolvable:$true] %s168
          %171 = dma.hbm_to_vmem [thread:$0]  %s167, 128, %s169, %s154
        $region28: #{tpu_custom_call.1} parent=23 // pred_fallthru
          _
      $region24: #{tpu_custom_call.1} parent=5 // pred_fallthru
        _
      %p172 = scmp.le.s32.totalorder 1, %s15
      %p173 = scmp.lt.s32.totalorder %s15, 3
      %p174 = pnand %p172, %p173
      %p175 = pneg %p174
      // Predicated region
      $region29: #{tpu_custom_call.1} parent=5 // pred_check
        _
      $region30: #{tpu_custom_call.1} parent=5 // pred_check_branch
        %177 = sbr.rel (%p174) target = $region32
      $region31: #{tpu_custom_call.1} parent=5 // pred_region
        %s178 = ssub.s32 %s15, 1
        %s179 = sand.u32 %s42, 1
        %s180 = scalar_lea.sflag [#allocation3], %s179
        %s181 = sand.u32 %s42, 1
        %s182 = smul.addr %s181, 8
        %s183 = scalar_lea.vmem [#allocation2], %s182
        // Predicated region
        $region33: #{tpu_custom_call.1} parent=31 // pred_check
          %p184 = pneg %p55
        $region34: #{tpu_custom_call.1} parent=31 // pred_check_branch
          %186 = sbr.rel (%p184) target = $region36
        $region35: #{tpu_custom_call.1} parent=31 // pred_region
          %188 = dma.done %s180, 128
        $region36: #{tpu_custom_call.1} parent=31 // pred_fallthru
          _
        %s189 = sand.u32 %s42, 1
        %s190 = scalar_lea.sflag [#allocation3], %s189
        %s191 = sand.u32 %s42, 1
        %s192 = smul.addr %s191, 8
        %s193 = scalar_lea.vmem [#allocation2], %s192
        %p194 = pneg %p55
        %p195 = pneg %p52
        %p196 = pneg %p76
        %p197 = pneg %p73
        %p198 = pneg %p97
        %p199 = pneg %p94
        %p200 = pneg %p125
        %p201 = pneg %p122
        %s202 = sand.u32 %s112, 1
        %s203 = scalar_lea.sflag [#allocation4], %s202
        %s204 = sand.u32 %s112, 1
        %s205 = smul.addr %s204, 8
        %s206 = scalar_lea.vmem [#allocation5], %s205
        %s207 = smul.u32 2, %s25
        %s208 = smul.u32 2, %s25
        %v209 = vld [vmem:[%s183] sm:$0xff]
        %211 = vst [vmem:[#allocation1] ss:$2 sm:$0xff] %v209
        %v212 = vld.sshfl [vmem:[#allocation1] sm:$0xff pattern:$0x75316420]
        %v213 = vld.sshfl [vmem:[#allocation1 + $0x8] sm:$0xff pattern:$0x75316420]
        %vm216 = vcmask 1043456
        %v217 = vsel %vm216, %v212, 0.0
        %v218 = vrot.slane %v217, 4
        %v219 = vadd.f32 %v217, %v218
        %v220 = vrot.slane %v219, 2
        %v221 = vadd.f32 %v219, %v220
        %v222 = vrot.slane %v221, 1
        %v223 = vadd.f32 %v221, %v222
        %v224 = vsel %vm216, %v213, 0.0
        %v225 = vrot.slane %v224, 4
        %v226 = vadd.f32 %v224, %v225
        %v227 = vrot.slane %v226, 2
        %v228 = vadd.f32 %v226, %v227
        %v229 = vrot.slane %v228, 1
        %v230 = vadd.f32 %v228, %v229
        %v231 = vrcp.pop 4.0
        %v232 = vmul.f32 4.0, %v231
        %v233 = vsub.f32 1.0, %v232
        %v234 = vmul.f32 %v231, %v233
        %v235 = vadd.f32 %v231, %v234
        %vm236 = vweird.f32 %v231
        %v237 = vsel %vm236, %v231, %v235
        %v238 = vmul.f32 %v223, %v237
        %v239 = vmul.f32 %v230, %v237
        %v240 = vmul.f32 %v209, %v209
        %242 = vst [vmem:[#allocation1] ss:$2 sm:$0xff] %v240
        %v243 = vld.sshfl [vmem:[#allocation1] sm:$0xff pattern:$0x75316420]
        %v244 = vld.sshfl [vmem:[#allocation1 + $0x8] sm:$0xff pattern:$0x75316420]
        %v247 = vsel %vm216, %v243, 0.0
        %v248 = vrot.slane %v247, 4
        %v249 = vadd.f32 %v247, %v248
        %v250 = vrot.slane %v249, 2
        %v251 = vadd.f32 %v249, %v250
        %v252 = vrot.slane %v251, 1
        %v253 = vadd.f32 %v251, %v252
        %v254 = vsel %vm216, %v244, 0.0
        %v255 = vrot.slane %v254, 4
        %v256 = vadd.f32 %v254, %v255
        %v257 = vrot.slane %v256, 2
        %v258 = vadd.f32 %v256, %v257
        %v259 = vrot.slane %v258, 1
        %v260 = vadd.f32 %v258, %v259
        %v261 = vmul.f32 %v253, %v237
        %v262 = vmul.f32 %v260, %v237
        %v263 = vmul.f32 %v238, %v238
        %v264 = vmul.f32 %v239, %v239
        %v265 = vsub.f32 %v261, %v263
        %v266 = vsub.f32 %v262, %v264
        %v267 = vmax.f32 %v265, 0.0
        %v268 = vmax.f32 %v266, 0.0
        %v269 = vadd.f32 %v267, 1e-06
        %v270 = vadd.f32 %v268, 1e-06
        %v271 = vrsqrt.pop %v269
        %v272 = vmul.f32 %v271, %v269
        %v273 = vmul.f32 %v272, %v271
        %v274 = vmul.f32 0.5, %v273
        %v275 = vsub.f32 1.5, %v274
        %v276 = vmul.f32 %v271, %v275
        %vm277 = vweird.f32 %v269
        %vm278 = vweird.f32 %v271
        %vm279 = vmor %vm277, %vm278
        %v280 = vsel %vm279, %v271, %v276
        %v281 = vrsqrt.pop %v270
        %v282 = vmul.f32 %v281, %v270
        %v283 = vmul.f32 %v282, %v281
        %v284 = vmul.f32 0.5, %v283
        %v285 = vsub.f32 1.5, %v284
        %v286 = vmul.f32 %v281, %v285
        %vm287 = vweird.f32 %v270
        %vm288 = vweird.f32 %v281
        %vm289 = vmor %vm287, %vm288
        %v290 = vsel %vm289, %v281, %v286
        %v291 = vld [vmem:[%s1] sm:$0xf]
        %v292 = vld [vmem:[%s2] sm:$0xf]
        %v295 = vrot.slane %v239, 4
        %v296 = vsel %vm216, %v238, %v295
        %v298 = vsub.f32 %v209, %v296
        %v301 = vrot.slane %v290, 4
        %v302 = vsel %vm216, %v280, %v301
        %v304 = vmul.f32 %v298, %v302
        %306 = vset.pattern.permute.xlu0 0
        %307 = vperm.xlu0 %306, %v291
        %v308 = vpop.permute.xlu0 %307
        %v310 = vunpack.c.l.s4 839922192
        %v311 = vunpack.c.0.s8 %v310
        %v312 = vperm.slane %v308, %v311
        %v314 = vmul.f32 %v304, %v312
        %316 = vset.pattern.permute.xlu0 0
        %317 = vperm.xlu0 %316, %v292
        %v318 = vpop.permute.xlu0 %317
        %v320 = vunpack.c.l.s4 839922192
        %v321 = vunpack.c.0.s8 %v320
        %v322 = vperm.slane %v318, %v321
        %v324 = vadd.f32 %v314, %v322
        %325 = vst [vmem:[%s206] sm:$0xff] %v324
        %s326 = sand.u32 %s112, 1
        %s327 = scalar_lea.sflag [#allocation4], %s326
        %s328 = sand.u32 %s112, 1
        %s329 = smul.addr %s328, 8
        %s330 = scalar_lea.vmem [#allocation5], %s329
        // Predicated region
        $region37: #{tpu_custom_call.1} parent=31 // pred_check
          %p331 = pneg %p122
        $region38: #{tpu_custom_call.1} parent=31 // pred_check_branch
          %333 = sbr.rel (%p331) target = $region40
        $region39: #{tpu_custom_call.1} parent=31 // pred_region
          %s334 = smul.u32 2, %s25
          %336 = vsyncadd %s327, 0
          %s337 = smul.addr %s24, 2
          %s338 = sadd.s32 %s334, %s337
          %s339 = smul.addr %s338, 4
          %s340 = scalar_lea.hbm %s3, %s339
          %s342 = sshll.u32 %s330, 4
          %s343 = int_to_ptr.vmem [resolvable:$true] %s342
          %s344 = sshll.u32 %s340, 4
          %s345 = int_to_ptr.hbm [resolvable:$true] %s344
          %347 = dma.vmem_to_hbm [thread:$0]  %s343, 128, %s345, %s327
        $region40: #{tpu_custom_call.1} parent=31 // pred_fallthru
          _
      $region32: #{tpu_custom_call.1} parent=5 // pred_fallthru
        _
      %p348 = scmp.le.s32.totalorder 2, %s15
      // Predicated region
      $region41: #{tpu_custom_call.1} parent=5 // pred_check
        %p349 = pneg %p348
      $region42: #{tpu_custom_call.1} parent=5 // pred_check_branch
        %351 = sbr.rel (%p349) target = $region44
      $region43: #{tpu_custom_call.1} parent=5 // pred_region
        %s352 = ssub.s32 %s15, 2
        // Predicated region
        $region45: #{tpu_custom_call.1} parent=43 // pred_check
          %p353 = pneg %p128
        $region46: #{tpu_custom_call.1} parent=43 // pred_check_branch
          %355 = sbr.rel (%p353) target = $region48
        $region47: #{tpu_custom_call.1} parent=43 // pred_region
          %s356 = sand.u32 %s113, 1
          %s357 = scalar_lea.sflag [#allocation4], %s356
          %s358 = sand.u32 %s113, 1
          %s359 = smul.addr %s358, 8
          %s360 = scalar_lea.vmem [#allocation5], %s359
          %362 = dma.done %s357, 128
        $region48: #{tpu_custom_call.1} parent=43 // pred_fallthru
          _
      $region44: #{tpu_custom_call.1} parent=5 // pred_fallthru
        _
    $region6: #{tpu_custom_call.1} parent=1 // loop_footer
      %s19 = sadd.s32 1, %s15
    $region7: #{tpu_custom_call.1} parent=1 // loop_footer_branch
      %14 = sbr.rel target = $region3
    $region8: #{tpu_custom_call.1} parent=1 // loop_exit
      _
    %363 = vsyncpa [#allocation3], 1
    %s364 = scalar_lea.sflag [#allocation3], 1
    %365 = vsyncpa %s364, 1
    %366 = vsyncpa [#allocation4], 1
    %s367 = scalar_lea.sflag [#allocation4], 1
    %368 = vsyncpa %s367, 1

</llo_original>
